<compile_context>
chip_gen: v7x
topology: tpu7x:2x2x1
jax: 0.10.0
libtpu: 0.0.40
codegen_flags: <defaults>
</compile_context>

<pallas_src>
import numpy as np
import jax
import jax.numpy as jnp
from jax.experimental import pallas as pl
from jax.experimental.pallas import tpu as pltpu


_LANES = 128          # vreg lane width — output last dim is always lane-dense
_MAX_TILE_ROWS = 512  # 512x128 uint32 in (256 KiB) + int8 out (64 KiB) per buffer
_MIN_TILE_ROWS = 32   # int8 minimum second-minor tile


def _cdiv(a, b):
    return (a + b - 1) // b


def _round_up(a, b):
    return _cdiv(a, b) * b


def _threshold_from_p(p: float) -> int:
    """uint32 threshold s.t.  (uniform uint32 bits < threshold)  ~  Bernoulli(p)."""
    t = int(round(float(p) * 4294967296.0))
    return max(0, min(t, 4294967295))


def _padded_layout(total: int):
    """Lane-dense slab layout for `total` mask elements: (rows_padded, 128)."""
    rows = max(1, _cdiv(total, _LANES))
    tile_rows = min(_MAX_TILE_ROWS, _round_up(rows, _MIN_TILE_ROWS))
    rows_padded = _round_up(rows, tile_rows)
    return rows_padded, tile_rows


# ---------------------------------------------------------------------------
# Pallas kernel: Bernoulli(p) mask from uniform uint32 bits
#   out[i, j] = int8(bits[i, j] < threshold)
# ---------------------------------------------------------------------------
def _make_bernoulli_kernel(threshold: int):
    def kernel(bits_ref, out_ref):
        out_ref[...] = (bits_ref[...] < jnp.uint32(threshold)).astype(jnp.int8)
    return kernel


def bernoulli_mask_pallas(bits2d: jax.Array, threshold: int, tile_rows: int) -> jax.Array:
    rows, lanes = bits2d.shape
    assert lanes == _LANES and rows % tile_rows == 0
    grid = rows // tile_rows
    return pl.pallas_call(
        _make_bernoulli_kernel(threshold),
        out_shape=jax.ShapeDtypeStruct((rows, lanes), jnp.int8),
        grid=(grid,),
        in_specs=[pl.BlockSpec((tile_rows, lanes), lambda i: (i, 0))],
        out_specs=pl.BlockSpec((tile_rows, lanes), lambda i: (i, 0)),
        compiler_params=pltpu.CompilerParams(
            dimension_semantics=("parallel",)),  # let v7x's 2 TCs split the tiles
    )(bits2d)


def sample_targets_pallas(key, threshold: int, size) -> jax.Array:
    """torch.rand(*size) < p, as a lane-dense Pallas compare kernel."""
    size = tuple(int(s) for s in size)
    total = int(np.prod(size)) if len(size) else 1
    rows_padded, tile_rows = _padded_layout(total)
    bits = jax.random.bits(key, (rows_padded, _LANES), dtype=jnp.uint32)
    mask8 = bernoulli_mask_pallas(bits, threshold, tile_rows)
    return mask8.reshape(-1)[:total].reshape(size).astype(jnp.bool_)


# ---------------------------------------------------------------------------
# JAX-side Channel mirroring the PyTorch base class
# ---------------------------------------------------------------------------
class Channel:
    def __init__(self, error_prob, max_len, vocab_size, seed=42):
        self.p = float(error_prob)
        self.vocab_size = int(vocab_size)
        self.max_len = int(max_len)
        self._key = jax.random.PRNGKey(int(seed))        # advances every call
        self._threshold = _threshold_from_p(self.p)
        self._max_message_entropy = {
            i: (i * self.max_non_eos_entropy(noise=True),
                i * self.max_non_eos_entropy(noise=False))
            for i in range(self.max_len + 1)
        }

    @staticmethod
    def binary_entropy(p: float):
        if p == 0.0 or p == 1.0:
            return 0.0
        return -p * np.log2(p) - (1 - p) * np.log2(1 - p)

    def max_non_eos_entropy(self, noise: bool):
        return np.log2(self.vocab_size - 1)

    def sample_targets(self, *size):
        # Advance the "generator" each call (like torch.Generator), then run the
        # Pallas integer-threshold compare kernel over lane-dense tiles.
        self._key, sub = jax.random.split(self._key)
        return sample_targets_pallas(sub, self._threshold, size)

    def max_message_entropy(self, length_probs, noise: bool):
        # Plain fused jnp (perf review: a (max_len+1,) vector is launch-overhead
        # dominated as a standalone kernel; XLA fuses this into its neighbors).
        lp = jnp.asarray(length_probs, jnp.float32)
        min_real = jnp.finfo(jnp.float32).min
        log2p = jnp.maximum(jnp.log2(lp), min_real)          # clamp(log2(p), min)
        idx = 1 - int(noise)
        per_len = jnp.asarray(
            [self._max_message_entropy[i][idx] for i in range(lp.shape[0])],
            dtype=jnp.float32)
        # single fused reduction:  H(L) + E_L[max conditional entropy]
        return jnp.sum(lp * (per_len - log2p))

    # TODO(synk): gs() / reinforce() are abstract in the reference Channel;
    # forward() only dispatches to them, so there is no concrete math to lower.
    def gs(self, messages, probs, apply_noise: bool):
        raise NotImplementedError

    def reinforce(self, messages, probs, apply_noise: bool, **kwargs):
        raise NotImplementedError

    def forward(self, messages, probs, *args, **kwargs):
        if messages.ndim == 3:
            return (self.gs(messages, probs, apply_noise=True),
                    self.gs(messages, probs, apply_noise=False))
        raise NotImplementedError


# ---------------------------------------------------------------------------
# Pure-numpy reference for max_message_entropy (mirrors the torch code path)
# ---------------------------------------------------------------------------
def _max_message_entropy_ref(length_probs, vocab_size, noise):
    length_probs = np.asarray(length_probs, dtype=np.float32)
    min_real = np.finfo(np.float32).min
    with np.errstate(divide="ignore"):
        log2p = np.maximum(np.log2(length_probs), min_real)
    max_entropy = float(np.sum(-length_probs * log2p))
    for i in range(len(length_probs)):
        max_entropy += float(length_probs[i]) * i * np.log2(vocab_size - 1)
    return max_entropy


if __name__ == "__main__":
    B, L, V = 2, 8, 16
    error_prob = 0.3

    ch = Channel(error_prob=error_prob, max_len=L, vocab_size=V, seed=42)

    key = jax.random.PRNGKey(0)
    k_msg, k_len, k_bits = jax.random.split(key, 3)

    # Inputs as forward() would see them: relaxed one-hot GS messages [B, L, V].
    logits = jax.random.normal(k_msg, (B, L, V), dtype=jnp.float32)
    messages = jax.nn.softmax(logits, axis=-1)
    probs = messages  # forward() takes (messages, probs); both [B, L, V]

    # Length-probability vector over lengths 0..max_len.
    raw = jax.random.uniform(k_len, (L + 1,), dtype=jnp.float32)
    length_probs = raw / jnp.sum(raw)

    # --- exact check of the Bernoulli-mask kernel against the same bits ---
    total = B * L
    rows_padded, tile_rows = _padded_layout(total)
    thr = _threshold_from_p(error_prob)
    bits = jax.random.bits(k_bits, (rows_padded, _LANES), dtype=jnp.uint32)
    mask8 = jax.block_until_ready(bernoulli_mask_pallas(bits, thr, tile_rows))
    ref8 = (np.asarray(bits) < np.uint32(thr)).astype(np.int8)
    assert np.array_equal(np.asarray(mask8), ref8)

    # --- Channel API: mask shape/dtype + advancing generator ---
    mask_a = jax.block_until_ready(ch.sample_targets(B, L))
    mask_b = jax.block_until_ready(ch.sample_targets(B, L))
    assert mask_a.shape == (B, L) and mask_a.dtype == jnp.bool_
    assert mask_b.shape == (B, L) and mask_b.dtype == jnp.bool_

    # --- larger, gridded mask: statistical sanity check ---
    big = jax.block_until_ready(ch.sample_targets(1024, 256))
    frac = float(jnp.mean(big.astype(jnp.float32)))
    assert abs(frac - error_prob) < 0.01, frac

    # --- max_message_entropy vs. numpy reference (both noise settings) ---
    h_noise = jax.block_until_ready(ch.max_message_entropy(length_probs, noise=True))
    h_clean = jax.block_until_ready(ch.max_message_entropy(length_probs, noise=False))
    ref = _max_message_entropy_ref(np.asarray(length_probs), V, noise=True)
    assert abs(float(h_noise) - ref) < 1e-3, (float(h_noise), ref)
    assert abs(float(h_clean) - ref) < 1e-3, (float(h_clean), ref)

    print("KERNEL_OK")
</pallas_src>

<mosaic_0001>
module attributes {stable_mosaic.version = 11 : i64} {
  func.func @kernel(%arg0: i32, %arg1: memref<32x128xi32, #tpu.memory_space<vmem>>, %arg2: memref<32x128xi8, #tpu.memory_space<vmem>>) attributes {dimension_semantics = [#tpu.dimension_semantics<parallel>], iteration_bounds = array<i64: 1>, scalar_prefetch = 0 : i64, scratch_operands = 0 : i64, tpu.core_type = #tpu.core_type<tc>, window_params = [{transform_indices = @transform_0, window_bounds = array<i64: 32, 128>}, {transform_indices = @transform_1, window_bounds = array<i64: 32, 128>}]} {
    %c0 = arith.constant 0 : index
    %c0_0 = arith.constant 0 : index
    %0 = vector.load %arg1[%c0, %c0_0] : memref<32x128xi32, #tpu.memory_space<vmem>>, vector<32x128xi32>
    %c1288490189_i32 = arith.constant 1288490189 : i32
    %1 = vector.broadcast %c1288490189_i32 : i32 to vector<32x128xi32>
    %2 = arith.cmpi ult, %0, %1 : vector<32x128xi32>
    %3 = arith.extui %2 : vector<32x128xi1> to vector<32x128xi8>
    %c0_1 = arith.constant 0 : index
    %c0_2 = arith.constant 0 : index
    %4 = vector.load %arg2[%c0_1, %c0_2] : memref<32x128xi8, #tpu.memory_space<vmem>>, vector<32x128xi8>
    tpu.vector_store %arg2[%c0_1, %c0_2], %3 {strides = array<i32>} : memref<32x128xi8, #tpu.memory_space<vmem>>, vector<32x128xi8>,
    return
  }
  func.func @transform_0(%arg0: i32) -> (i32, i32) {
    %c0_i32 = arith.constant 0 : i32
    %c0_i32_0 = arith.constant 0 : i32
    return %arg0, %c0_i32 : i32, i32
  }
  func.func @transform_1(%arg0: i32) -> (i32, i32) {
    %c0_i32 = arith.constant 0 : i32
    %c0_i32_0 = arith.constant 0 : i32
    return %arg0, %c0_i32 : i32, i32
  }
}

</mosaic_0001>

<llo_original>
// kernel: tpu_custom_call.1
$region0: #{tpu_custom_call.1}
  #allocation0 [shape = 'u32[]', space=smem, size = 0x4, offset = 0x4, fixed_abs, tag = 'smem constant byte address 0x4 - core index']
  #allocation1 [shape = 'u32[144,128]{1,0:T(1,128)}', space=vmem, size = 0x12000, scoped, tag = 'internal scratch']
  %s0 = inlined_call_operand.hbm [shape: u32[32,128], index: 0, kind: input, shape index: {}]
  %s1 = inlined_call_operand.hbm [shape: s8[32,128], index: 1, kind: output, shape index: {}]
  %s2 = sld [smem:[#allocation0]]
  $region18: #{tpu_custom_call.1} parent=0
    _
  %s4 = ssub.s32 1, %s2
  %s5 = scalar_select 0, %s4, %s2
  $region1: #{tpu_custom_call.1} parent=0
    #allocation2 [shape = 'u8[16384]{0}', space=vmem, size = 0x4000, scoped, tag = 'input window, operand 0, single buffered']
    #allocation3 [shape = 's32[1]{0}', space=sflag, size = 0x4, scoped, tag = 'scoped memory for tpu_custom_call.1']
    #allocation4 [shape = 's32[1]{0}', space=sflag, size = 0x4, scoped, tag = 'scoped memory for tpu_custom_call.1']
    #allocation5 [shape = 'u8[4096]{0}', space=vmem, size = 0x1000, scoped, tag = 'output window, operand 0, single buffered']
    %6 = vsyncpa [#allocation3], 0
    %7 = vsyncpa [#allocation4], 0
    // Predicated region
    $region2: #{tpu_custom_call.1} parent=1 // pred_check
      _
    $region3: #{tpu_custom_call.1} parent=1 // pred_check_branch
      %9 = sbr.rel (0) target = $region5
    $region4: #{tpu_custom_call.1} parent=1 // pred_region
      %s11 = ssub.s32 512, 512
      %12 = vsyncadd [#allocation3], %s11
      %s13 = sshll.u32 [#allocation2], 4
      %s14 = int_to_ptr.vmem [resolvable:$true] %s13
      %19 = dma.hbm_to_vmem [thread:$0]  %s0, 512, %s14, [#allocation3], 128, 128, 8
    $region5: #{tpu_custom_call.1} parent=1 // pred_fallthru
      _
    // Predicated region
    $region6: #{tpu_custom_call.1} parent=1 // pred_check
      _
    $region7: #{tpu_custom_call.1} parent=1 // pred_check_branch
      %21 = sbr.rel (0) target = $region9
    $region8: #{tpu_custom_call.1} parent=1 // pred_region
      %22 = dma.done [#allocation3], 512
    $region9: #{tpu_custom_call.1} parent=1 // pred_fallthru
      _
    %v25 = vld [vmem:[#allocation2] sm:$0xff]
    %v26 = vld [vmem:[#allocation2 + $0x8] sm:$0xff]
    %v27 = vld [vmem:[#allocation2 + $0x10] sm:$0xff]
    %v28 = vld [vmem:[#allocation2 + $0x18] sm:$0xff]
    %vm29 = vcmp.lt.u32.totalorder %v25, 1288490189
    %vm30 = vcmp.lt.u32.totalorder %v26, 1288490189
    %vm31 = vcmp.lt.u32.totalorder %v27, 1288490189
    %vm32 = vcmp.lt.u32.totalorder %v28, 1288490189
    %vm33 = vmpackc.low %vm30, %vm29
    %vm34 = vmpackc.low %vm32, %vm31
    %vm35 = vmpackc.even %vm34, %vm33
    %v36 = vsel %vm35, 16843009, 0
    %37 = vst [vmem:[#allocation5] sm:$0xff] %v36
    // Predicated region
    $region10: #{tpu_custom_call.1} parent=1 // pred_check
      _
    $region11: #{tpu_custom_call.1} parent=1 // pred_check_branch
      %39 = sbr.rel (0) target = $region13
    $region12: #{tpu_custom_call.1} parent=1 // pred_region
      %s41 = ssub.s32 128, 128
      %42 = vsyncadd [#allocation4], %s41
      %s44 = sshll.u32 [#allocation5], 4
      %s45 = int_to_ptr.vmem [resolvable:$true] %s44
      %47 = dma.vmem_to_hbm [thread:$0]  %s45, 128, %s1, [#allocation4]
    $region13: #{tpu_custom_call.1} parent=1 // pred_fallthru
      _
    // Predicated region
    $region14: #{tpu_custom_call.1} parent=1 // pred_check
      _
    $region15: #{tpu_custom_call.1} parent=1 // pred_check_branch
      %49 = sbr.rel (0) target = $region17
    $region16: #{tpu_custom_call.1} parent=1 // pred_region
      %50 = dma.done [#allocation4], 128
    $region17: #{tpu_custom_call.1} parent=1 // pred_fallthru
      _
    %51 = vsyncpa [#allocation3], 1
    %52 = vsyncpa [#allocation4], 1

</llo_original>
